<compile_context>
chip_gen: v7x
topology: tpu7x:2x2x1
jax: 0.10.0
libtpu: 0.0.40
codegen_flags: <defaults>
</compile_context>

<pallas_src>
import functools

import jax
import jax.numpy as jnp
from jax.experimental import pallas as pl
from jax.experimental.pallas import tpu as pltpu


def _round_up(x, m):
    return ((x + m - 1) // m) * m


def _cdiv(a, b):
    return (a + b - 1) // b


def _corr2d_kernel(x_ref, w_ref, b_ref, y_ref, *, kh, kw, tm, tm_in, w_slab, extra_w):
    """One row-tile of valid 2-D cross-correlation.

    x_ref: (h_in_pad, w_slab + extra_w) f32 — whole zero-padded input, VMEM resident
    w_ref: (kh*kw,) f32 taps in SMEM
    b_ref: (1,) f32 bias in SMEM
    y_ref: (tm, w_slab) f32 output tile in VMEM (lane-dense)
    """
    i = pl.program_id(0)
    row0 = pl.multiple_of(i * tm, 8)

    # Single aligned load of this tile's rows (+ row halo). All shifted windows
    # are derived in-register (static row slices + XLU lane rotates), not new
    # VMEM loads.
    xv = x_ref[pl.ds(row0, tm_in), :]

    # Scalar taps hoisted out of the unrolled loop (one SMEM read each).
    taps = [w_ref[t] for t in range(kh * kw)]

    # Two interleaved running accumulators: bounds live full-tile temporaries
    # (vs. kh*kw live terms + tree) while still splitting the serial VALU add
    # chain in two.
    acc = [None, None]
    t = 0
    for di in range(kh):
        rows = xv[di:di + tm, :]
        for dj in range(kw):
            if extra_w == 0:
                # The output slab's own lane padding already covers the kw-1
                # column halo: shift columns with an XLU lane rotate. Wrapped
                # lanes only land in columns >= wo, which the caller crops.
                win = rows if dj == 0 else pltpu.roll(rows, shift=w_slab - dj, axis=1)
            else:
                win = rows[:, dj:dj + w_slab]
            term = win * taps[t]
            s = t & 1
            acc[s] = term if acc[s] is None else acc[s] + term
            t += 1
    out = acc[0] if acc[1] is None else acc[0] + acc[1]

    # Single, unmasked, lane-dense store (write once; no read-modify-write).
    y_ref[...] = out + b_ref[0]


def conv2d_forward(x, weight, bias, *, tm_target=256):
    """Equivalent of Conv2d.forward: corr2d(x, weight) + bias."""
    x = x.astype(jnp.float32)
    weight = weight.astype(jnp.float32)
    bias = jnp.asarray(bias, jnp.float32).reshape((1,))

    h, w = x.shape
    kh, kw = weight.shape
    ho, wo = h - kh + 1, w - kw + 1

    # ---- lane geometry ------------------------------------------------------
    w_slab = max(_round_up(wo, 128), 128)      # lane-dense output slab width
    slack = w_slab - wo
    # Only pay for a lane-aligned column halo when the slab's own padding does
    # not already cover the kw-1 extra columns the taps need.
    extra_w = 0 if slack >= kw - 1 else _round_up(kw - 1, 128)
    w_in_pad = w_slab + extra_w

    # ---- row geometry: balanced tiles, even split for v7x's 2 TCs -----------
    grid_rows = _cdiv(ho, tm_target)
    if ho >= 16:
        grid_rows = max(grid_rows, 2)
        if grid_rows % 2:
            grid_rows += 1
    tm = max(8, _round_up(_cdiv(ho, grid_rows), 8))
    ho_pad = tm * grid_rows

    extra_h = _round_up(kh - 1, 8)             # row halo, sublane aligned
    tm_in = tm + extra_h
    h_in_pad = ho_pad + extra_h

    # TODO(synk): for maps too large to stay resident in VMEM, switch to a
    # per-row-tile halo DMA variant (memory_space=pl.ANY + make_async_copy, or
    # pipeline_mode=pl.Buffered(1) on the resident spec); for this module's
    # single small 2-D maps the whole padded x fits comfortably and is read
    # from HBM exactly once.
    # TODO(synk): the wrapper jnp.pad and the final crop are extra HBM passes;
    # in-kernel edge masking / allow_input_fusion would remove them on
    # memory-bound v5e.
    x_pad = jnp.pad(x, ((0, h_in_pad - h), (0, w_in_pad - w)))
    w_flat = weight.reshape(-1)                # 1-D avoids 2-D SMEM tile padding

    # ---- generation-aware VMEM budget ---------------------------------------
    try:
        vmem_cap = int(pltpu.get_tpu_info().vmem_capacity_bytes)
    except Exception:
        vmem_cap = 64 * 1024 * 1024            # conservative (v7x-sized) fallback
    vmem_budget = vmem_cap - 8 * 1024 * 1024   # headroom for Mosaic internal scratch

    x_bytes = h_in_pad * w_in_pad * 4
    out_tile_bytes = tm * w_slab * 4
    work_bytes = (tm_in * w_in_pad + 6 * tm * w_slab) * 4
    need = 2 * x_bytes + 2 * out_tile_bytes + work_bytes   # double-buffered specs
    if need > vmem_budget:
        raise NotImplementedError(
            "input too large for the resident-x kernel on this TPU generation "
            f"(needs ~{need >> 20} MiB VMEM, budget {vmem_budget >> 20} MiB); "
            "see TODO(synk) per-tile halo-DMA variant.")
    vmem_limit = int(min(max(need, 16 * 1024 * 1024), vmem_budget))

    kernel = functools.partial(_corr2d_kernel, kh=kh, kw=kw, tm=tm,
                               tm_in=tm_in, w_slab=w_slab, extra_w=extra_w)

    y_pad = pl.pallas_call(
        kernel,
        out_shape=jax.ShapeDtypeStruct((ho_pad, w_slab), jnp.float32),
        grid=(grid_rows,),
        in_specs=[
            pl.BlockSpec((h_in_pad, w_in_pad), lambda i: (0, 0)),  # x resident
            pl.BlockSpec(memory_space=pltpu.MemorySpace.SMEM),     # weight taps
            pl.BlockSpec(memory_space=pltpu.MemorySpace.SMEM),     # bias
        ],
        out_specs=pl.BlockSpec((tm, w_slab), lambda i: (i, 0)),
        compiler_params=pltpu.CompilerParams(
            dimension_semantics=("parallel",),   # row tiles shard over v7x's 2 TCs
            vmem_limit_bytes=vmem_limit),
    )(x_pad, w_flat, bias)

    # Slice the valid (HO, WO) region out of the lane-dense slab.
    return y_pad[:ho, :wo]


def _corr2d_ref(x, k):
    """Pure-JAX reference identical to the PyTorch corr2d loop."""
    kh, kw = k.shape
    ho, wo = x.shape[0] - kh + 1, x.shape[1] - kw + 1
    out = jnp.zeros((ho, wo), jnp.float32)
    for di in range(kh):
        for dj in range(kw):
            out = out + x[di:di + ho, dj:dj + wo] * k[di, dj]
    return out


def _check(h, w, kh, kw, key):
    k_x, k_w = jax.random.split(key)
    x = jax.random.uniform(k_x, (h, w), dtype=jnp.float32)
    weight = jax.random.uniform(k_w, (kh, kw), dtype=jnp.float32)
    bias = jnp.zeros((1,), dtype=jnp.float32)
    y = jax.block_until_ready(conv2d_forward(x, weight, bias))
    y_ref = _corr2d_ref(x, weight) + bias[0]
    assert y.shape == (h - kh + 1, w - kw + 1)
    assert jnp.allclose(y, y_ref, atol=1e-5, rtol=1e-5)
    return y


if __name__ == "__main__":
    key = jax.random.PRNGKey(0)
    k0, k1, k2 = jax.random.split(key, 3)

    # Primary case, consistent with the module: single 16x16 map, 3x3 kernel
    # (torch.rand((H, W)), nn.Parameter(torch.rand(kernel_size)), zero bias).
    _check(16, 16, 3, 3, k0)

    # Multi-row-tile path (even 2-tile grid) and the roll-based column shifts.
    _check(40, 24, 3, 3, k1)

    # Path that still needs the explicit 128-lane column halo (wo=127).
    _check(24, 129, 3, 3, k2)

    print("KERNEL_OK")
</pallas_src>

<mosaic_0001>
module attributes {stable_mosaic.version = 11 : i64} {
  func.func @_corr2d_kernel(%arg0: i32, %arg1: memref<24x128xf32, #tpu.memory_space<vmem>>, %arg2: memref<9xf32, #tpu.memory_space<smem>>, %arg3: memref<1xf32, #tpu.memory_space<smem>>, %arg4: memref<16x128xf32, #tpu.memory_space<vmem>>) attributes {dimension_semantics = [#tpu.dimension_semantics<parallel>], iteration_bounds = array<i64: 1>, scalar_prefetch = 0 : i64, scratch_operands = 0 : i64, tpu.core_type = #tpu.core_type<tc>, window_params = [{pipeline_mode = #tpu.pipeline_mode<synchronous>, transform_indices = @transform_0, window_bounds = array<i64: 24, 128>}, {transform_indices = @transform_1, window_bounds = array<i64: 9>}, {transform_indices = @transform_2, window_bounds = array<i64: 1>}, {transform_indices = @transform_3, window_bounds = array<i64: 16, 128>}]} {
    %c16_i32 = arith.constant 16 : i32
    %0 = arith.muli %arg0, %c16_i32 : i32
    %1 = tpu.assume_multiple %0, 8 : i32
    %2 = arith.index_cast %1 : i32 to index
    %c0 = arith.constant 0 : index
    %3 = vector.load %arg1[%2, %c0] : memref<24x128xf32, #tpu.memory_space<vmem>>, vector<24x128xf32>
    %c0_0 = arith.constant 0 : index
    %4 = memref.load %arg2[%c0_0] : memref<9xf32, #tpu.memory_space<smem>>
    %c1 = arith.constant 1 : index
    %5 = memref.load %arg2[%c1] : memref<9xf32, #tpu.memory_space<smem>>
    %c2 = arith.constant 2 : index
    %6 = memref.load %arg2[%c2] : memref<9xf32, #tpu.memory_space<smem>>
    %c3 = arith.constant 3 : index
    %7 = memref.load %arg2[%c3] : memref<9xf32, #tpu.memory_space<smem>>
    %c4 = arith.constant 4 : index
    %8 = memref.load %arg2[%c4] : memref<9xf32, #tpu.memory_space<smem>>
    %c5 = arith.constant 5 : index
    %9 = memref.load %arg2[%c5] : memref<9xf32, #tpu.memory_space<smem>>
    %c6 = arith.constant 6 : index
    %10 = memref.load %arg2[%c6] : memref<9xf32, #tpu.memory_space<smem>>
    %c7 = arith.constant 7 : index
    %11 = memref.load %arg2[%c7] : memref<9xf32, #tpu.memory_space<smem>>
    %c8 = arith.constant 8 : index
    %12 = memref.load %arg2[%c8] : memref<9xf32, #tpu.memory_space<smem>>
    %13 = vector.extract_strided_slice %3 {offsets = [0, 0], sizes = [16, 128], strides = [1, 1]} : vector<24x128xf32> to vector<16x128xf32>
    %14 = vector.broadcast %4 : f32 to vector<16x128xf32>
    %15 = arith.mulf %13, %14 : vector<16x128xf32>
    %c127_i32 = arith.constant 127 : i32
    %16 = tpu.dynamic_rotate %13 by %c127_i32 dim 1 : vector<16x128xf32>, i32 -> vector<16x128xf32>
    %17 = vector.broadcast %5 : f32 to vector<16x128xf32>
    %18 = arith.mulf %16, %17 : vector<16x128xf32>
    %c126_i32 = arith.constant 126 : i32
    %19 = tpu.dynamic_rotate %13 by %c126_i32 dim 1 : vector<16x128xf32>, i32 -> vector<16x128xf32>
    %20 = vector.broadcast %6 : f32 to vector<16x128xf32>
    %21 = arith.mulf %19, %20 : vector<16x128xf32>
    %22 = arith.addf %15, %21 : vector<16x128xf32>
    %23 = vector.extract_strided_slice %3 {offsets = [1, 0], sizes = [16, 128], strides = [1, 1]} : vector<24x128xf32> to vector<16x128xf32>
    %24 = vector.broadcast %7 : f32 to vector<16x128xf32>
    %25 = arith.mulf %23, %24 : vector<16x128xf32>
    %26 = arith.addf %18, %25 : vector<16x128xf32>
    %c127_i32_1 = arith.constant 127 : i32
    %27 = tpu.dynamic_rotate %23 by %c127_i32_1 dim 1 : vector<16x128xf32>, i32 -> vector<16x128xf32>
    %28 = vector.broadcast %8 : f32 to vector<16x128xf32>
    %29 = arith.mulf %27, %28 : vector<16x128xf32>
    %30 = arith.addf %22, %29 : vector<16x128xf32>
    %c126_i32_2 = arith.constant 126 : i32
    %31 = tpu.dynamic_rotate %23 by %c126_i32_2 dim 1 : vector<16x128xf32>, i32 -> vector<16x128xf32>
    %32 = vector.broadcast %9 : f32 to vector<16x128xf32>
    %33 = arith.mulf %31, %32 : vector<16x128xf32>
    %34 = arith.addf %26, %33 : vector<16x128xf32>
    %35 = vector.extract_strided_slice %3 {offsets = [2, 0], sizes = [16, 128], strides = [1, 1]} : vector<24x128xf32> to vector<16x128xf32>
    %36 = vector.broadcast %10 : f32 to vector<16x128xf32>
    %37 = arith.mulf %35, %36 : vector<16x128xf32>
    %38 = arith.addf %30, %37 : vector<16x128xf32>
    %c127_i32_3 = arith.constant 127 : i32
    %39 = tpu.dynamic_rotate %35 by %c127_i32_3 dim 1 : vector<16x128xf32>, i32 -> vector<16x128xf32>
    %40 = vector.broadcast %11 : f32 to vector<16x128xf32>
    %41 = arith.mulf %39, %40 : vector<16x128xf32>
    %42 = arith.addf %34, %41 : vector<16x128xf32>
    %c126_i32_4 = arith.constant 126 : i32
    %43 = tpu.dynamic_rotate %35 by %c126_i32_4 dim 1 : vector<16x128xf32>, i32 -> vector<16x128xf32>
    %44 = vector.broadcast %12 : f32 to vector<16x128xf32>
    %45 = arith.mulf %43, %44 : vector<16x128xf32>
    %46 = arith.addf %38, %45 : vector<16x128xf32>
    %47 = arith.addf %46, %42 : vector<16x128xf32>
    %c0_5 = arith.constant 0 : index
    %48 = memref.load %arg3[%c0_5] : memref<1xf32, #tpu.memory_space<smem>>
    %49 = vector.broadcast %48 : f32 to vector<16x128xf32>
    %50 = arith.addf %47, %49 : vector<16x128xf32>
    %c0_6 = arith.constant 0 : index
    %c0_7 = arith.constant 0 : index
    %51 = vector.load %arg4[%c0_6, %c0_7] : memref<16x128xf32, #tpu.memory_space<vmem>>, vector<16x128xf32>
    tpu.vector_store %arg4[%c0_6, %c0_7], %50 {strides = array<i32>} : memref<16x128xf32, #tpu.memory_space<vmem>>, vector<16x128xf32>,
    return
  }
  func.func @transform_0(%arg0: i32) -> (i32, i32) {
    %c0_i32 = arith.constant 0 : i32
    %c0_i32_0 = arith.constant 0 : i32
    %c0_i32_1 = arith.constant 0 : i32
    return %c0_i32, %c0_i32_0 : i32, i32
  }
  func.func @transform_1(%arg0: i32) -> i32 {
    %c0_i32 = arith.constant 0 : i32
    %c0_i32_0 = arith.constant 0 : i32
    return %c0_i32 : i32
  }
  func.func @transform_2(%arg0: i32) -> i32 {
    %c0_i32 = arith.constant 0 : i32
    %c0_i32_0 = arith.constant 0 : i32
    return %c0_i32 : i32
  }
  func.func @transform_3(%arg0: i32) -> (i32, i32) {
    %c0_i32 = arith.constant 0 : i32
    %c0_i32_0 = arith.constant 0 : i32
    return %arg0, %c0_i32 : i32, i32
  }
}

</mosaic_0001>

<llo_original>
// kernel: tpu_custom_call.1
$region0: #{tpu_custom_call.1}
  #allocation0 [shape = 'u32[]', space=smem, size = 0x4, offset = 0x4, fixed_abs, tag = 'smem constant byte address 0x4 - core index']
  #allocation1 [shape = 'u32[144,128]{1,0:T(1,128)}', space=vmem, size = 0x12000, scoped, tag = 'internal scratch']
  #allocation2 [shape = 'f32[1]{0:T(128)S(6)}', space=smem, size = 0x200, scoped, tag = 'scoped memory for tpu_custom_call.1']
  %s0 = inlined_call_operand.hbm [shape: f32[24,128], index: 0, kind: input, shape index: {}]
  %s1 = inlined_call_operand.vmem [shape: f32[9], index: 1, kind: input, shape index: {}]
  %s2 = inlined_call_operand.<no memory space> [shape: f32[1], index: 2, kind: input, shape index: {}]
  %s3 = inlined_call_operand.hbm [shape: f32[16,128], index: 3, kind: output, shape index: {}]
  %s4 = sld [smem:[#allocation0]]
  $region30: #{tpu_custom_call.1} parent=0
    _
  %s6 = ssub.s32 1, %s4
  %s7 = scalar_select 0, %s6, %s4
  %8 = sst [smem:[#allocation2]] %s2
  $region1: #{tpu_custom_call.1} parent=0
    #allocation3 [shape = 'u8[12288]{0}', space=vmem, size = 0x3000, scoped, tag = 'input window, operand 0, single buffered']
    #allocation4 [shape = 's32[1]{0}', space=sflag, size = 0x4, scoped, tag = 'scoped memory for tpu_custom_call.1']
    #allocation5 [shape = 's32[1]{0}', space=sflag, size = 0x4, scoped, tag = 'scoped memory for tpu_custom_call.1']
    #allocation6 [shape = 's32[1]{0}', space=sflag, size = 0x4, scoped, tag = 'scoped memory for tpu_custom_call.1']
    #allocation7 [shape = 'u8[512]{0}', space=smem, size = 0x200, scoped, tag = 'input window, operand 1, single buffered']
    #allocation8 [shape = 'u8[8192]{0}', space=vmem, size = 0x2000, scoped, tag = 'output window, operand 0, single buffered']
    %9 = vsyncpa [#allocation4], 0
    %10 = vsyncpa [#allocation6], 0
    %11 = vsyncpa [#allocation5], 0
    // Predicated region
    $region2: #{tpu_custom_call.1} parent=1 // pred_check
      _
    $region3: #{tpu_custom_call.1} parent=1 // pred_check_branch
      %13 = sbr.rel (0) target = $region5
    $region4: #{tpu_custom_call.1} parent=1 // pred_region
      %s15 = ssub.s32 384, 384
      %16 = vsyncadd [#allocation4], %s15
      %s17 = sshll.u32 [#allocation3], 4
      %s18 = int_to_ptr.vmem [resolvable:$true] %s17
      %23 = dma.hbm_to_vmem [thread:$0]  %s0, 384, %s18, [#allocation4], 128, 128, 8
    $region5: #{tpu_custom_call.1} parent=1 // pred_fallthru
      _
    // Predicated region
    $region6: #{tpu_custom_call.1} parent=1 // pred_check
      _
    $region7: #{tpu_custom_call.1} parent=1 // pred_check_branch
      %25 = sbr.rel (0) target = $region9
    $region8: #{tpu_custom_call.1} parent=1 // pred_region
      %s27 = ssub.s32 16, 16
      %28 = vsyncadd [#allocation6], %s27
      %s30 = sshll.u32 %s1, 4
      %s31 = int_to_ptr.vmem [resolvable:$true] %s30
      %33 = dma.vmem_to_smem %s31, 16, [#allocation7], [#allocation6]
    $region9: #{tpu_custom_call.1} parent=1 // pred_fallthru
      _
    // Predicated region
    $region10: #{tpu_custom_call.1} parent=1 // pred_check
      _
    $region11: #{tpu_custom_call.1} parent=1 // pred_check_branch
      %35 = sbr.rel (0) target = $region13
    $region12: #{tpu_custom_call.1} parent=1 // pred_region
      _
    $region13: #{tpu_custom_call.1} parent=1 // pred_fallthru
      _
    // Predicated region
    $region14: #{tpu_custom_call.1} parent=1 // pred_check
      _
    $region15: #{tpu_custom_call.1} parent=1 // pred_check_branch
      %37 = sbr.rel (0) target = $region17
    $region16: #{tpu_custom_call.1} parent=1 // pred_region
      %38 = dma.done [#allocation4], 384
    $region17: #{tpu_custom_call.1} parent=1 // pred_fallthru
      _
    // Predicated region
    $region18: #{tpu_custom_call.1} parent=1 // pred_check
      _
    $region19: #{tpu_custom_call.1} parent=1 // pred_check_branch
      %40 = sbr.rel (0) target = $region21
    $region20: #{tpu_custom_call.1} parent=1 // pred_region
      %41 = dma.done [#allocation6], 16
    $region21: #{tpu_custom_call.1} parent=1 // pred_fallthru
      _
    %42 = sfence
    %s43 = smul.u32 0, 16
    %s44 = scalar_lea.vmem [#allocation3], %s43
    %v45 = vld [vmem:[%s44] sm:$0xff]
    %v46 = vld [vmem:[%s44 + $0x8] sm:$0xff]
    %v47 = vld [vmem:[%s44 + $0x10] sm:$0xff]
    %s48 = sld [smem:[#allocation7]]
    %s49 = sld [smem:[#allocation7 + $0x1]]
    %s50 = sld [smem:[#allocation7 + $0x2]]
    %s51 = sld [smem:[#allocation7 + $0x3]]
    %s52 = sld [smem:[#allocation7 + $0x4]]
    %s53 = sld [smem:[#allocation7 + $0x5]]
    %s54 = sld [smem:[#allocation7 + $0x6]]
    %s55 = sld [smem:[#allocation7 + $0x7]]
    %s56 = sld [smem:[#allocation7 + $0x8]]
    %v57 = vstv %s48
    %v58 = vmul.f32 %v45, %v57
    %v59 = vmul.f32 %v46, %v57
    %60 = vrot.lane.b32.xlu0 %v45, 127
    %v61 = vpop.permute.xlu0 %60
    %62 = vrot.lane.b32.xlu0 %v46, 127
    %v63 = vpop.permute.xlu0 %62
    %v64 = vstv %s49
    %v65 = vmul.f32 %v61, %v64
    %v66 = vmul.f32 %v63, %v64
    %67 = vrot.lane.b32.xlu0 %v45, 126
    %v68 = vpop.permute.xlu0 %67
    %69 = vrot.lane.b32.xlu0 %v46, 126
    %v70 = vpop.permute.xlu0 %69
    %v71 = vstv %s50
    %v72 = vmul.f32 %v68, %v71
    %v73 = vmul.f32 %v70, %v71
    %v74 = vadd.f32 %v58, %v72
    %v75 = vadd.f32 %v59, %v73
    %v76 = vstv %s51
    %v77 = vmul.f32 %v45, %v76
    %v78 = vmul.f32 %v46, %v76
    %v79 = vmul.f32 %v47, %v76
    %vm83 = vcmask 1046528
    %v84 = vrot.slane %v77, 1
    %v85 = vrot.slane %v78, 1
    %v86 = vsel %vm83, %v84, %v85
    %v87 = vrot.slane %v79, 1
    %v88 = vsel %vm83, %v85, %v87
    %v91 = vadd.f32 %v65, %v86
    %v92 = vadd.f32 %v66, %v88
    %v96 = vrot.slane %v45, 1
    %v97 = vrot.slane %v46, 1
    %v98 = vsel %vm83, %v96, %v97
    %v99 = vrot.slane %v47, 1
    %v100 = vsel %vm83, %v97, %v99
    %103 = vrot.lane.b32.xlu0 %v98, 127
    %v104 = vpop.permute.xlu0 %103
    %105 = vrot.lane.b32.xlu0 %v100, 127
    %v106 = vpop.permute.xlu0 %105
    %v107 = vstv %s52
    %v108 = vmul.f32 %v104, %v107
    %v109 = vmul.f32 %v106, %v107
    %v110 = vadd.f32 %v74, %v108
    %v111 = vadd.f32 %v75, %v109
    %112 = vrot.lane.b32.xlu0 %v98, 126
    %v113 = vpop.permute.xlu0 %112
    %114 = vrot.lane.b32.xlu0 %v100, 126
    %v115 = vpop.permute.xlu0 %114
    %v116 = vstv %s53
    %v117 = vmul.f32 %v113, %v116
    %v118 = vmul.f32 %v115, %v116
    %v119 = vadd.f32 %v91, %v117
    %v120 = vadd.f32 %v92, %v118
    %v121 = vstv %s54
    %v122 = vmul.f32 %v45, %v121
    %v123 = vmul.f32 %v46, %v121
    %v124 = vmul.f32 %v47, %v121
    %vm128 = vcmask 1045504
    %v129 = vrot.slane %v122, 2
    %v130 = vrot.slane %v123, 2
    %v131 = vsel %vm128, %v129, %v130
    %v132 = vrot.slane %v124, 2
    %v133 = vsel %vm128, %v130, %v132
    %v136 = vadd.f32 %v110, %v131
    %v137 = vadd.f32 %v111, %v133
    %v138 = vrot.slane %v45, 2
    %v139 = vrot.slane %v46, 2
    %v140 = vsel %vm128, %v138, %v139
    %v141 = vrot.slane %v47, 2
    %v142 = vsel %vm128, %v139, %v141
    %145 = vrot.lane.b32.xlu0 %v140, 127
    %v146 = vpop.permute.xlu0 %145
    %147 = vrot.lane.b32.xlu0 %v142, 127
    %v148 = vpop.permute.xlu0 %147
    %v149 = vstv %s55
    %v150 = vmul.f32 %v146, %v149
    %v151 = vmul.f32 %v148, %v149
    %v152 = vadd.f32 %v119, %v150
    %v153 = vadd.f32 %v120, %v151
    %154 = vrot.lane.b32.xlu0 %v140, 126
    %v155 = vpop.permute.xlu0 %154
    %156 = vrot.lane.b32.xlu0 %v142, 126
    %v157 = vpop.permute.xlu0 %156
    %v158 = vstv %s56
    %v159 = vmul.f32 %v155, %v158
    %v160 = vmul.f32 %v157, %v158
    %v161 = vadd.f32 %v136, %v159
    %v162 = vadd.f32 %v137, %v160
    %v163 = vadd.f32 %v161, %v152
    %v164 = vadd.f32 %v162, %v153
    %s165 = sld [smem:[#allocation2]]
    %v166 = vstv %s165
    %v167 = vadd.f32 %v163, %v166
    %v168 = vadd.f32 %v164, %v166
    %169 = vst [vmem:[#allocation8] sm:$0xff] %v167
    %170 = vst [vmem:[#allocation8 + $0x8] sm:$0xff] %v168
    // Predicated region
    $region22: #{tpu_custom_call.1} parent=1 // pred_check
      _
    $region23: #{tpu_custom_call.1} parent=1 // pred_check_branch
      %172 = sbr.rel (0) target = $region25
    $region24: #{tpu_custom_call.1} parent=1 // pred_region
      %s174 = ssub.s32 256, 256
      %175 = vsyncadd [#allocation5], %s174
      %s176 = sshll.u32 [#allocation8], 4
      %s177 = int_to_ptr.vmem [resolvable:$true] %s176
      %182 = dma.vmem_to_hbm [thread:$0]  %s177, 256, %s3, [#allocation5], 128, 128, 8
    $region25: #{tpu_custom_call.1} parent=1 // pred_fallthru
      _
    // Predicated region
    $region26: #{tpu_custom_call.1} parent=1 // pred_check
      _
    $region27: #{tpu_custom_call.1} parent=1 // pred_check_branch
      %184 = sbr.rel (0) target = $region29
    $region28: #{tpu_custom_call.1} parent=1 // pred_region
      %185 = dma.done [#allocation5], 256
    $region29: #{tpu_custom_call.1} parent=1 // pred_fallthru
      _
    %186 = vsyncpa [#allocation4], 1
    %187 = vsyncpa [#allocation5], 1
    %188 = vsyncpa [#allocation6], 1

</llo_original>
